<compile_context>
chip_gen: v7x
topology: tpu7x:2x2x1
jax: 0.10.0
libtpu: 0.0.40
codegen_flags: <defaults>
</compile_context>

<pallas_src>
import jax
import jax.numpy as jnp
from jax.experimental import pallas as pl
from jax.experimental.pallas import tpu as pltpu

IN_F = 10
HID_F = 20
OUT_F = 16
LANES = 128
PACK = LANES // OUT_F        # 8 batch rows packed per 128-lane output row
DEFAULT_TM = 4096            # batch tile (multiple of 64)


def _round_up(n, m):
    return ((n + m - 1) // m) * m


def simplenet_kernel(x_ref, w0_ref, b0_ref, w1_ref, b1_ref, o_ref):
    x = x_ref[...]                                   # (TM, 10)
    if x.dtype != jnp.float32:
        x = x.astype(jnp.float32)                    # PyTorch: X.float()
    # lin0 + ReLU: (TM,10) @ (10,20) + (1,20)
    h = jnp.dot(x, w0_ref[...], preferred_element_type=jnp.float32) + b0_ref[...]
    h = jnp.maximum(h, 0.0)
    # lin1: (TM,20) @ (20,16) + (1,16)
    y = jnp.dot(h, w1_ref[...], preferred_element_type=jnp.float32) + b1_ref[...]

    # Lane-dense pack into the (TM//PACK, 128) output block:
    #   o[r, c*16:(c+1)*16] = y[c*(TM//PACK) + r, :]
    # Only contiguous, sublane-aligned value slices + static lane-slice stores.
    n_rows = o_ref.shape[0]                          # TM // PACK (multiple of 8)
    for c in range(PACK):
        o_ref[:, c * OUT_F:(c + 1) * OUT_F] = y[c * n_rows:(c + 1) * n_rows, :]


def simplenet_forward_packed(x, w0, b0, w1, b1, *, tm=DEFAULT_TM):
    """Returns (packed, tm, steps): packed is (steps*tm//PACK, 128) f32."""
    B = x.shape[0]
    Bp = _round_up(max(B, 1), 64)                    # pad ragged batches to 64
    if Bp != B:
        x = jnp.pad(x, ((0, Bp - B), (0, 0)))        # zeros; sliced off on unpack
    # Balanced batch tiles: multiple of 64, >=2 roughly-equal steps when B > tm.
    steps = pl.cdiv(Bp, tm)
    tm = _round_up(pl.cdiv(Bp, steps), 64)
    steps = pl.cdiv(Bp, tm)
    tm8 = tm // PACK
    out_rows = steps * tm8

    flops = 2 * Bp * (IN_F * HID_F + HID_F * OUT_F)
    bytes_accessed = (x.size * x.dtype.itemsize
                      + out_rows * LANES * 4
                      + (w0.size + b0.size + w1.size + b1.size) * 4)

    packed = pl.pallas_call(
        simplenet_kernel,
        out_shape=jax.ShapeDtypeStruct((out_rows, LANES), jnp.float32),
        grid_spec=pltpu.PrefetchScalarGridSpec(
            num_scalar_prefetch=0,
            grid=(steps,),
            in_specs=[
                pl.BlockSpec((tm, IN_F), lambda i: (i, 0)),      # X: tiled batch
                pl.BlockSpec((IN_F, HID_F), lambda i: (0, 0)),   # W0: VMEM-resident
                pl.BlockSpec((1, HID_F), lambda i: (0, 0)),      # b0
                pl.BlockSpec((HID_F, OUT_F), lambda i: (0, 0)),  # W1
                pl.BlockSpec((1, OUT_F), lambda i: (0, 0)),      # b1
            ],
            out_specs=pl.BlockSpec((tm8, LANES), lambda i: (i, 0)),
        ),
        compiler_params=pltpu.CompilerParams(
            # Batch steps are independent -> shard across TCs on v7x megacore.
            dimension_semantics=("parallel",),
        ),
        cost_estimate=pl.CostEstimate(flops=flops, transcendentals=0,
                                      bytes_accessed=bytes_accessed),
    )(x, w0, b0, w1, b1)
    return packed, tm, steps


def simplenet_forward(x, w0, b0, w1, b1, *, tm=DEFAULT_TM):
    """Module-compatible API: (B, 10) -> (B, 16)."""
    B = x.shape[0]
    packed, tm_used, steps = simplenet_forward_packed(x, w0, b0, w1, b1, tm=tm)
    tm8 = tm_used // PACK
    # Unpack the lane-dense slab back to row-major (B, 16) in the wrapper.
    y = (packed.reshape(steps, tm8, PACK, OUT_F)
               .transpose(0, 2, 1, 3)
               .reshape(steps * tm_used, OUT_F))
    return y[:B]


def init_params(key):
    # Deterministic init mimicking nn.Linear's uniform(-1/sqrt(fan_in), ...).
    k0, k1, k2, k3 = jax.random.split(key, 4)
    bound0 = 1.0 / jnp.sqrt(IN_F)
    bound1 = 1.0 / jnp.sqrt(HID_F)
    # Stored as (in, out): PyTorch weight (out, in) transposed.
    w0 = jax.random.uniform(k0, (IN_F, HID_F), jnp.float32, -bound0, bound0)
    b0 = jax.random.uniform(k1, (1, HID_F), jnp.float32, -bound0, bound0)
    w1 = jax.random.uniform(k2, (HID_F, OUT_F), jnp.float32, -bound1, bound1)
    b1 = jax.random.uniform(k3, (1, OUT_F), jnp.float32, -bound1, bound1)
    return w0, b0, w1, b1


if __name__ == "__main__":
    key = jax.random.PRNGKey(0)
    k_p, k1, k2, k3, k4, k5 = jax.random.split(key, 6)
    w0, b0, w1, b1 = init_params(k_p)

    def ref(x):
        return jnp.maximum(x.astype(jnp.float32) @ w0 + b0, 0.0) @ w1 + b1

    # 1) Small aligned batch, single grid step.
    x = jax.random.normal(k1, (8, IN_F), jnp.float32)
    out = jax.block_until_ready(simplenet_forward(x, w0, b0, w1, b1))
    assert out.shape == (8, OUT_F)
    assert jnp.allclose(out, ref(x), atol=1e-5, rtol=1e-5)

    # 2) Ragged tiny batches (B not a multiple of 8) -- sublane-padded edge.
    for kk, b in ((k2, 5), (k3, 13)):
        xb = jax.random.normal(kk, (b, IN_F), jnp.float32)
        ob = jax.block_until_ready(simplenet_forward(xb, w0, b0, w1, b1))
        assert ob.shape == (b, OUT_F)
        assert jnp.allclose(ob, ref(xb), atol=1e-5, rtol=1e-5)

    # 3) Multi-step tiled path with a partial final x block (small tile override).
    x3 = jax.random.normal(k4, (300, IN_F), jnp.float32)
    o3 = jax.block_until_ready(simplenet_forward(x3, w0, b0, w1, b1, tm=128))
    assert o3.shape == (300, OUT_F)
    assert jnp.allclose(o3, ref(x3), atol=1e-5, rtol=1e-5)

    # 4) bf16 input (kernel upcasts, matching PyTorch's X.float()).
    x4 = jax.random.normal(k5, (16, IN_F), jnp.float32).astype(jnp.bfloat16)
    o4 = jax.block_until_ready(simplenet_forward(x4, w0, b0, w1, b1))
    assert o4.shape == (16, OUT_F)
    assert jnp.allclose(o4, ref(x4), atol=1e-5, rtol=1e-5)

    print("KERNEL_OK")
</pallas_src>

<mosaic_0001>
module attributes {stable_mosaic.version = 11 : i64} {
  func.func @simplenet_kernel(%arg0: i32, %arg1: memref<64x10xf32, #tpu.memory_space<vmem>>, %arg2: memref<10x20xf32, #tpu.memory_space<vmem>>, %arg3: memref<1x20xf32, #tpu.memory_space<vmem>>, %arg4: memref<20x16xf32, #tpu.memory_space<vmem>>, %arg5: memref<1x16xf32, #tpu.memory_space<vmem>>, %arg6: memref<8x128xf32, #tpu.memory_space<vmem>>) attributes {dimension_semantics = [#tpu.dimension_semantics<parallel>], iteration_bounds = array<i64: 1>, scalar_prefetch = 0 : i64, scratch_operands = 0 : i64, tpu.core_type = #tpu.core_type<tc>, window_params = [{transform_indices = @transform_0, window_bounds = array<i64: 64, 10>}, {pipeline_mode = #tpu.pipeline_mode<synchronous>, transform_indices = @transform_1, window_bounds = array<i64: 10, 20>}, {pipeline_mode = #tpu.pipeline_mode<synchronous>, transform_indices = @transform_2, window_bounds = array<i64: 1, 20>}, {pipeline_mode = #tpu.pipeline_mode<synchronous>, transform_indices = @transform_3, window_bounds = array<i64: 20, 16>}, {pipeline_mode = #tpu.pipeline_mode<synchronous>, transform_indices = @transform_4, window_bounds = array<i64: 1, 16>}, {transform_indices = @transform_5, window_bounds = array<i64: 8, 128>}]} {
    %c0 = arith.constant 0 : index
    %c0_0 = arith.constant 0 : index
    %0 = vector.load %arg1[%c0, %c0_0] : memref<64x10xf32, #tpu.memory_space<vmem>>, vector<64x10xf32>
    %c0_1 = arith.constant 0 : index
    %c0_2 = arith.constant 0 : index
    %1 = vector.load %arg2[%c0_1, %c0_2] : memref<10x20xf32, #tpu.memory_space<vmem>>, vector<10x20xf32>
    %cst = arith.constant dense<0.000000e+00> : vector<64x20xf32>
    %2 = tpu.matmul %0, %1, %cst {dimension_numbers = #tpu.dot_dimension_numbers<[1], [0], [0], [1], [0, 0, 1, 1], [], []>} : vector<64x10xf32>, vector<10x20xf32>, vector<64x20xf32> -> vector<64x20xf32>
    %c0_3 = arith.constant 0 : index
    %c0_4 = arith.constant 0 : index
    %3 = vector.load %arg3[%c0_3, %c0_4] : memref<1x20xf32, #tpu.memory_space<vmem>>, vector<1x20xf32>
    %4 = vector.broadcast %3 : vector<1x20xf32> to vector<64x20xf32>
    %5 = arith.addf %2, %4 : vector<64x20xf32>
    %cst_5 = arith.constant 0.000000e+00 : f32
    %6 = vector.broadcast %cst_5 : f32 to vector<64x20xf32>
    %7 = arith.maximumf %5, %6 : vector<64x20xf32>
    %c0_6 = arith.constant 0 : index
    %c0_7 = arith.constant 0 : index
    %8 = vector.load %arg4[%c0_6, %c0_7] : memref<20x16xf32, #tpu.memory_space<vmem>>, vector<20x16xf32>
    %cst_8 = arith.constant dense<0.000000e+00> : vector<64x16xf32>
    %9 = tpu.matmul %7, %8, %cst_8 {dimension_numbers = #tpu.dot_dimension_numbers<[1], [0], [0], [1], [0, 0, 1, 1], [], []>} : vector<64x20xf32>, vector<20x16xf32>, vector<64x16xf32> -> vector<64x16xf32>
    %c0_9 = arith.constant 0 : index
    %c0_10 = arith.constant 0 : index
    %10 = vector.load %arg5[%c0_9, %c0_10] : memref<1x16xf32, #tpu.memory_space<vmem>>, vector<1x16xf32>
    %11 = vector.broadcast %10 : vector<1x16xf32> to vector<64x16xf32>
    %12 = arith.addf %9, %11 : vector<64x16xf32>
    %13 = vector.extract_strided_slice %12 {offsets = [0, 0], sizes = [8, 16], strides = [1, 1]} : vector<64x16xf32> to vector<8x16xf32>
    %c0_11 = arith.constant 0 : index
    %c0_12 = arith.constant 0 : index
    %14 = vector.load %arg6[%c0_11, %c0_12] : memref<8x128xf32, #tpu.memory_space<vmem>>, vector<8x16xf32>
    tpu.vector_store %arg6[%c0_11, %c0_12], %13 {strides = array<i32>} : memref<8x128xf32, #tpu.memory_space<vmem>>, vector<8x16xf32>,
    %15 = vector.extract_strided_slice %12 {offsets = [8, 0], sizes = [8, 16], strides = [1, 1]} : vector<64x16xf32> to vector<8x16xf32>
    %c0_13 = arith.constant 0 : index
    %c16 = arith.constant 16 : index
    %16 = vector.load %arg6[%c0_13, %c16] : memref<8x128xf32, #tpu.memory_space<vmem>>, vector<8x16xf32>
    tpu.vector_store %arg6[%c0_13, %c16], %15 {strides = array<i32>} : memref<8x128xf32, #tpu.memory_space<vmem>>, vector<8x16xf32>,
    %17 = vector.extract_strided_slice %12 {offsets = [16, 0], sizes = [8, 16], strides = [1, 1]} : vector<64x16xf32> to vector<8x16xf32>
    %c0_14 = arith.constant 0 : index
    %c32 = arith.constant 32 : index
    %18 = vector.load %arg6[%c0_14, %c32] : memref<8x128xf32, #tpu.memory_space<vmem>>, vector<8x16xf32>
    tpu.vector_store %arg6[%c0_14, %c32], %17 {strides = array<i32>} : memref<8x128xf32, #tpu.memory_space<vmem>>, vector<8x16xf32>,
    %19 = vector.extract_strided_slice %12 {offsets = [24, 0], sizes = [8, 16], strides = [1, 1]} : vector<64x16xf32> to vector<8x16xf32>
    %c0_15 = arith.constant 0 : index
    %c48 = arith.constant 48 : index
    %20 = vector.load %arg6[%c0_15, %c48] : memref<8x128xf32, #tpu.memory_space<vmem>>, vector<8x16xf32>
    tpu.vector_store %arg6[%c0_15, %c48], %19 {strides = array<i32>} : memref<8x128xf32, #tpu.memory_space<vmem>>, vector<8x16xf32>,
    %21 = vector.extract_strided_slice %12 {offsets = [32, 0], sizes = [8, 16], strides = [1, 1]} : vector<64x16xf32> to vector<8x16xf32>
    %c0_16 = arith.constant 0 : index
    %c64 = arith.constant 64 : index
    %22 = vector.load %arg6[%c0_16, %c64] : memref<8x128xf32, #tpu.memory_space<vmem>>, vector<8x16xf32>
    tpu.vector_store %arg6[%c0_16, %c64], %21 {strides = array<i32>} : memref<8x128xf32, #tpu.memory_space<vmem>>, vector<8x16xf32>,
    %23 = vector.extract_strided_slice %12 {offsets = [40, 0], sizes = [8, 16], strides = [1, 1]} : vector<64x16xf32> to vector<8x16xf32>
    %c0_17 = arith.constant 0 : index
    %c80 = arith.constant 80 : index
    %24 = vector.load %arg6[%c0_17, %c80] : memref<8x128xf32, #tpu.memory_space<vmem>>, vector<8x16xf32>
    tpu.vector_store %arg6[%c0_17, %c80], %23 {strides = array<i32>} : memref<8x128xf32, #tpu.memory_space<vmem>>, vector<8x16xf32>,
    %25 = vector.extract_strided_slice %12 {offsets = [48, 0], sizes = [8, 16], strides = [1, 1]} : vector<64x16xf32> to vector<8x16xf32>
    %c0_18 = arith.constant 0 : index
    %c96 = arith.constant 96 : index
    %26 = vector.load %arg6[%c0_18, %c96] : memref<8x128xf32, #tpu.memory_space<vmem>>, vector<8x16xf32>
    tpu.vector_store %arg6[%c0_18, %c96], %25 {strides = array<i32>} : memref<8x128xf32, #tpu.memory_space<vmem>>, vector<8x16xf32>,
    %27 = vector.extract_strided_slice %12 {offsets = [56, 0], sizes = [8, 16], strides = [1, 1]} : vector<64x16xf32> to vector<8x16xf32>
    %c0_19 = arith.constant 0 : index
    %c112 = arith.constant 112 : index
    %28 = vector.load %arg6[%c0_19, %c112] : memref<8x128xf32, #tpu.memory_space<vmem>>, vector<8x16xf32>
    tpu.vector_store %arg6[%c0_19, %c112], %27 {strides = array<i32>} : memref<8x128xf32, #tpu.memory_space<vmem>>, vector<8x16xf32>,
    return
  }
  func.func @transform_0(%arg0: i32) -> (i32, i32) {
    %c0_i32 = arith.constant 0 : i32
    %c0_i32_0 = arith.constant 0 : i32
    return %arg0, %c0_i32 : i32, i32
  }
  func.func @transform_1(%arg0: i32) -> (i32, i32) {
    %c0_i32 = arith.constant 0 : i32
    %c0_i32_0 = arith.constant 0 : i32
    %c0_i32_1 = arith.constant 0 : i32
    return %c0_i32, %c0_i32_0 : i32, i32
  }
  func.func @transform_2(%arg0: i32) -> (i32, i32) {
    %c0_i32 = arith.constant 0 : i32
    %c0_i32_0 = arith.constant 0 : i32
    %c0_i32_1 = arith.constant 0 : i32
    return %c0_i32, %c0_i32_0 : i32, i32
  }
  func.func @transform_3(%arg0: i32) -> (i32, i32) {
    %c0_i32 = arith.constant 0 : i32
    %c0_i32_0 = arith.constant 0 : i32
    %c0_i32_1 = arith.constant 0 : i32
    return %c0_i32, %c0_i32_0 : i32, i32
  }
  func.func @transform_4(%arg0: i32) -> (i32, i32) {
    %c0_i32 = arith.constant 0 : i32
    %c0_i32_0 = arith.constant 0 : i32
    %c0_i32_1 = arith.constant 0 : i32
    return %c0_i32, %c0_i32_0 : i32, i32
  }
  func.func @transform_5(%arg0: i32) -> (i32, i32) {
    %c0_i32 = arith.constant 0 : i32
    %c0_i32_0 = arith.constant 0 : i32
    return %arg0, %c0_i32 : i32, i32
  }
}

</mosaic_0001>

<llo_original>
// kernel: tpu_custom_call.1
$region0: #{tpu_custom_call.1}
  #allocation0 [shape = 'u32[]', space=smem, size = 0x4, offset = 0x4, fixed_abs, tag = 'smem constant byte address 0x4 - core index']
  #allocation1 [shape = 'u32[144,128]{1,0:T(1,128)}', space=vmem, size = 0x12000, scoped, tag = 'internal scratch']
  %s0 = inlined_call_operand.vmem [shape: f32[64,10], index: 0, kind: input, shape index: {}]
  %s1 = inlined_call_operand.vmem [shape: f32[10,20], index: 1, kind: input, shape index: {}]
  %s2 = inlined_call_operand.vmem [shape: f32[1,20], index: 2, kind: input, shape index: {}]
  %s3 = inlined_call_operand.vmem [shape: f32[20,16], index: 3, kind: input, shape index: {}]
  %s4 = inlined_call_operand.vmem [shape: f32[1,16], index: 4, kind: input, shape index: {}]
  %s5 = inlined_call_operand.hbm [shape: f32[8,128], index: 5, kind: output, shape index: {}]
  %s6 = sld [smem:[#allocation0]]
  $region30: #{tpu_custom_call.1} parent=0
    _
  %s8 = ssub.s32 1, %s6
  %s9 = scalar_select 0, %s8, %s6
  $region1: #{tpu_custom_call.1} parent=0
    #allocation2 [shape = 'u8[4096]{0}', space=vmem, size = 0x1000, scoped, tag = 'output window, operand 0, single buffered']
    #allocation3 [shape = 's32[1]{0}', space=sflag, size = 0x4, scoped, tag = 'scoped memory for tpu_custom_call.1']
    %10 = vsyncpa [#allocation3], 0
    // Predicated region
    $region2: #{tpu_custom_call.1} parent=1 // pred_check
      _
    $region3: #{tpu_custom_call.1} parent=1 // pred_check_branch
      %12 = sbr.rel (0) target = $region5
    $region4: #{tpu_custom_call.1} parent=1 // pred_region
      _
    $region5: #{tpu_custom_call.1} parent=1 // pred_fallthru
      _
    // Predicated region
    $region6: #{tpu_custom_call.1} parent=1 // pred_check
      _
    $region7: #{tpu_custom_call.1} parent=1 // pred_check_branch
      %14 = sbr.rel (0) target = $region9
    $region8: #{tpu_custom_call.1} parent=1 // pred_region
      _
    $region9: #{tpu_custom_call.1} parent=1 // pred_fallthru
      _
    // Predicated region
    $region10: #{tpu_custom_call.1} parent=1 // pred_check
      _
    $region11: #{tpu_custom_call.1} parent=1 // pred_check_branch
      %16 = sbr.rel (0) target = $region13
    $region12: #{tpu_custom_call.1} parent=1 // pred_region
      _
    $region13: #{tpu_custom_call.1} parent=1 // pred_fallthru
      _
    // Predicated region
    $region14: #{tpu_custom_call.1} parent=1 // pred_check
      _
    $region15: #{tpu_custom_call.1} parent=1 // pred_check_branch
      %18 = sbr.rel (0) target = $region17
    $region16: #{tpu_custom_call.1} parent=1 // pred_region
      _
    $region17: #{tpu_custom_call.1} parent=1 // pred_fallthru
      _
    // Predicated region
    $region18: #{tpu_custom_call.1} parent=1 // pred_check
      _
    $region19: #{tpu_custom_call.1} parent=1 // pred_check_branch
      %20 = sbr.rel (0) target = $region21
    $region20: #{tpu_custom_call.1} parent=1 // pred_region
      _
    $region21: #{tpu_custom_call.1} parent=1 // pred_fallthru
      _
    %v21 = vld [vmem:[%s0] sm:$0xff]
    %v22 = vld [vmem:[%s0 + $0x8] sm:$0xff]
    %v23 = vld [vmem:[%s0 + $0x10] sm:$0xff]
    %v24 = vld [vmem:[%s0 + $0x18] sm:$0xff]
    %v25 = vld [vmem:[%s0 + $0x20] sm:$0xff]
    %v26 = vld [vmem:[%s0 + $0x28] sm:$0xff]
    %v27 = vld [vmem:[%s0 + $0x30] sm:$0xff]
    %v28 = vld [vmem:[%s0 + $0x38] sm:$0xff]
    %v29 = vld [vmem:[%s1] sm:$0xff]
    %v30 = vld [vmem:[%s1 + $0x8] sm:$0x3]
    %v31 = vld [vmem:[%s2] sm:$0x1]
    %v33 = vlaneseq
    %v34 = vshrl.u32 %v33, 7
    %v35 = vsub.s32 0, %v34
    %v36 = vrot.slane %v31, %v35
    %vm38 = vcmask 80896
    %v40 = vsel %vm38, %v21, 0
    %v43 = vsel %vm38, %v22, 0
    %v46 = vsel %vm38, %v23, 0
    %v49 = vsel %vm38, %v24, 0
    %v52 = vsel %vm38, %v25, 0
    %v55 = vsel %vm38, %v26, 0
    %v58 = vsel %vm38, %v27, 0
    %v61 = vsel %vm38, %v28, 0
    %vm63 = vcmask 1041408
    %v65 = vsel %vm63, %v30, 0
    %67 = vmatprep.subr.mxu0 0.0
    %68 = vmatpush1.msra.mxu0 %v29
    %69 = vmatprep.subr.mxu0 0.0
    %70 = vmatpush1.msra.mxu0 %v65
    %71 = vmatprep.subr.mxu0 0.0
    %72 = vmatpush1.msra.mxu0 0.0
    %73 = vmatprep.subr.mxu0 0.0
    %74 = vmatpush1.msra.mxu0 0.0
    %75 = vmatprep.subr.mxu0 0.0
    %76 = vmatpush1.msra.mxu0 0.0
    %77 = vmatprep.subr.mxu0 0.0
    %78 = vmatpush1.msra.mxu0 0.0
    %79 = vmatprep.subr.mxu0 0.0
    %80 = vmatpush1.msra.mxu0 0.0
    %81 = vmatprep.subr.mxu0 0.0
    %82 = vmatpush1.msra.mxu0 0.0
    %83 = vmatprep.subr.mxu0 0.0
    %84 = vmatpush1.msra.mxu0 0.0
    %85 = vmatprep.subr.mxu0 0.0
    %86 = vmatpush1.msra.mxu0 0.0
    %87 = vmatprep.subr.mxu0 0.0
    %88 = vmatpush1.msra.mxu0 0.0
    %89 = vmatprep.subr.mxu0 0.0
    %90 = vmatpush1.msra.mxu0 0.0
    %91 = vmatprep.subr.mxu0 0.0
    %92 = vmatpush1.msra.mxu0 0.0
    %93 = vmatprep.subr.mxu0 0.0
    %94 = vmatpush1.msra.mxu0 0.0
    %95 = vmatprep.subr.mxu0 0.0
    %96 = vmatpush1.msra.mxu0 0.0
    %97 = vmatprep.subr.mxu0 0.0
    %98 = vmatpush1.msra.mxu0 0.0
    %99 = vmatprep.subr.mxu0 0.0
    %100 = vmatpush1.msra.mxu0 0.0
    %101 = vmatprep.subr.mxu0 0.0
    %102 = vmatpush1.msra.mxu0 0.0
    %103 = vmatprep.subr.mxu0 0.0
    %104 = vmatpush1.msra.mxu0 0.0
    %105 = vmatprep.subr.mxu0 0.0
    %106 = vmatpush1.msra.mxu0 0.0
    %107 = vmatprep.subr.mxu0 0.0
    %108 = vmatpush1.msra.mxu0 0.0
    %109 = vmatprep.subr.mxu0 0.0
    %110 = vmatpush1.msra.mxu0 0.0
    %111 = vmatprep.subr.mxu0 0.0
    %112 = vmatpush1.msra.mxu0 0.0
    %113 = vmatprep.subr.mxu0 0.0
    %114 = vmatpush1.msra.mxu0 0.0
    %115 = vmatprep.subr.mxu0 0.0
    %116 = vmatpush1.msra.mxu0 0.0
    %117 = vmatprep.subr.mxu0 0.0
    %118 = vmatpush1.msra.mxu0 0.0
    %119 = vmatprep.subr.mxu0 0.0
    %120 = vmatpush1.msra.mxu0 0.0
    %121 = vmatprep.subr.mxu0 0.0
    %122 = vmatpush1.msra.mxu0 0.0
    %123 = vmatprep.subr.mxu0 0.0
    %124 = vmatpush1.msra.mxu0 0.0
    %125 = vmatprep.subr.mxu0 0.0
    %126 = vmatpush1.msra.mxu0 0.0
    %127 = vmatprep.subr.mxu0 0.0
    %128 = vmatpush1.msra.mxu0 0.0
    %129 = vmatprep.subr.mxu0 0.0
    %130 = vmatpush1.msra.mxu0 0.0
    %131 = vmatprep.mubr.f32.mxu0 0.0
    %132 = vmatmul.mubr.f32.gmra.mrb[0].mxu0 %v40
    %v133 = vpop.f32.mrb[0].mxu0
    %v134 = vadd.f32 %v36, %v133
    %v135 = vpop.f32.mrb[0].mxu0
    %136 = vmatprep.mubr.f32.mxu0 0.0
    %137 = vmatmul.mubr.f32.gmra.mrb[0].mxu0 %v43
    %v138 = vpop.f32.mrb[0].mxu0
    %v139 = vadd.f32 %v36, %v138
    %v140 = vpop.f32.mrb[0].mxu0
    %141 = vmatprep.mubr.f32.mxu0 0.0
    %142 = vmatmul.mubr.f32.gmra.mrb[0].mxu0 %v46
    %v143 = vpop.f32.mrb[0].mxu0
    %v144 = vadd.f32 %v36, %v143
    %v145 = vpop.f32.mrb[0].mxu0
    %146 = vmatprep.mubr.f32.mxu0 0.0
    %147 = vmatmul.mubr.f32.gmra.mrb[0].mxu0 %v49
    %v148 = vpop.f32.mrb[0].mxu0
    %v149 = vadd.f32 %v36, %v148
    %v150 = vpop.f32.mrb[0].mxu0
    %151 = vmatprep.mubr.f32.mxu0 0.0
    %152 = vmatmul.mubr.f32.gmra.mrb[0].mxu0 %v52
    %v153 = vpop.f32.mrb[0].mxu0
    %v154 = vadd.f32 %v36, %v153
    %v155 = vpop.f32.mrb[0].mxu0
    %156 = vmatprep.mubr.f32.mxu0 0.0
    %157 = vmatmul.mubr.f32.gmra.mrb[0].mxu0 %v55
    %v158 = vpop.f32.mrb[0].mxu0
    %v159 = vadd.f32 %v36, %v158
    %v160 = vpop.f32.mrb[0].mxu0
    %161 = vmatprep.mubr.f32.mxu0 0.0
    %162 = vmatmul.mubr.f32.gmra.mrb[0].mxu0 %v58
    %v163 = vpop.f32.mrb[0].mxu0
    %v164 = vadd.f32 %v36, %v163
    %v165 = vpop.f32.mrb[0].mxu0
    %166 = vmatprep.mubr.f32.mxu0 0.0
    %167 = vmatmul.mubr.f32.gmra.mrb[0].mxu0 %v61
    %v168 = vpop.f32.mrb[0].mxu0
    %v169 = vadd.f32 %v36, %v168
    %v170 = vpop.f32.mrb[0].mxu0
    %171 = vdwg.mxu0
    %v172 = vmax.f32 %v134, 0.0
    %v173 = vmax.f32 %v139, 0.0
    %v174 = vmax.f32 %v144, 0.0
    %v175 = vmax.f32 %v149, 0.0
    %v176 = vmax.f32 %v154, 0.0
    %v177 = vmax.f32 %v159, 0.0
    %v178 = vmax.f32 %v164, 0.0
    %v179 = vmax.f32 %v169, 0.0
    %v180 = vld [vmem:[%s3] sm:$0xff]
    %v181 = vld [vmem:[%s3 + $0x8] sm:$0xff]
    %v182 = vld [vmem:[%s3 + $0x10] sm:$0xf]
    %v183 = vld [vmem:[%s4] sm:$0x1]
    %v185 = vlaneseq
    %v186 = vshrl.u32 %v185, 7
    %v187 = vsub.s32 0, %v186
    %v188 = vrot.slane %v183, %v187
    %vm190 = vcmask 162816
    %v192 = vsel %vm190, %v172, 0
    %v195 = vsel %vm190, %v173, 0
    %v198 = vsel %vm190, %v174, 0
    %v201 = vsel %vm190, %v175, 0
    %v204 = vsel %vm190, %v176, 0
    %v207 = vsel %vm190, %v177, 0
    %v210 = vsel %vm190, %v178, 0
    %v213 = vsel %vm190, %v179, 0
    %vm215 = vcmask 1043456
    %v217 = vsel %vm215, %v182, 0
    %219 = vmatprep.subr.mxu0 0.0
    %220 = vmatpush1.msra.mxu0 %v180
    %221 = vmatprep.subr.mxu0 0.0
    %222 = vmatpush1.msra.mxu0 %v181
    %223 = vmatprep.subr.mxu0 0.0
    %224 = vmatpush1.msra.mxu0 %v217
    %225 = vmatprep.subr.mxu0 0.0
    %226 = vmatpush1.msra.mxu0 0.0
    %227 = vmatprep.subr.mxu0 0.0
    %228 = vmatpush1.msra.mxu0 0.0
    %229 = vmatprep.subr.mxu0 0.0
    %230 = vmatpush1.msra.mxu0 0.0
    %231 = vmatprep.subr.mxu0 0.0
    %232 = vmatpush1.msra.mxu0 0.0
    %233 = vmatprep.subr.mxu0 0.0
    %234 = vmatpush1.msra.mxu0 0.0
    %235 = vmatprep.subr.mxu0 0.0
    %236 = vmatpush1.msra.mxu0 0.0
    %237 = vmatprep.subr.mxu0 0.0
    %238 = vmatpush1.msra.mxu0 0.0
    %239 = vmatprep.subr.mxu0 0.0
    %240 = vmatpush1.msra.mxu0 0.0
    %241 = vmatprep.subr.mxu0 0.0
    %242 = vmatpush1.msra.mxu0 0.0
    %243 = vmatprep.subr.mxu0 0.0
    %244 = vmatpush1.msra.mxu0 0.0
    %245 = vmatprep.subr.mxu0 0.0
    %246 = vmatpush1.msra.mxu0 0.0
    %247 = vmatprep.subr.mxu0 0.0
    %248 = vmatpush1.msra.mxu0 0.0
    %249 = vmatprep.subr.mxu0 0.0
    %250 = vmatpush1.msra.mxu0 0.0
    %251 = vmatprep.subr.mxu0 0.0
    %252 = vmatpush1.msra.mxu0 0.0
    %253 = vmatprep.subr.mxu0 0.0
    %254 = vmatpush1.msra.mxu0 0.0
    %255 = vmatprep.subr.mxu0 0.0
    %256 = vmatpush1.msra.mxu0 0.0
    %257 = vmatprep.subr.mxu0 0.0
    %258 = vmatpush1.msra.mxu0 0.0
    %259 = vmatprep.subr.mxu0 0.0
    %260 = vmatpush1.msra.mxu0 0.0
    %261 = vmatprep.subr.mxu0 0.0
    %262 = vmatpush1.msra.mxu0 0.0
    %263 = vmatprep.subr.mxu0 0.0
    %264 = vmatpush1.msra.mxu0 0.0
    %265 = vmatprep.subr.mxu0 0.0
    %266 = vmatpush1.msra.mxu0 0.0
    %267 = vmatprep.subr.mxu0 0.0
    %268 = vmatpush1.msra.mxu0 0.0
    %269 = vmatprep.subr.mxu0 0.0
    %270 = vmatpush1.msra.mxu0 0.0
    %271 = vmatprep.subr.mxu0 0.0
    %272 = vmatpush1.msra.mxu0 0.0
    %273 = vmatprep.subr.mxu0 0.0
    %274 = vmatpush1.msra.mxu0 0.0
    %275 = vmatprep.subr.mxu0 0.0
    %276 = vmatpush1.msra.mxu0 0.0
    %277 = vmatprep.subr.mxu0 0.0
    %278 = vmatpush1.msra.mxu0 0.0
    %279 = vmatprep.subr.mxu0 0.0
    %280 = vmatpush1.msra.mxu0 0.0
    %281 = vmatprep.subr.mxu0 0.0
    %282 = vmatpush1.msra.mxu0 0.0
    %283 = vmatprep.mubr.f32.mxu0 0.0
    %284 = vmatmul.mubr.f32.gmra.mrb[0].mxu0 %v192
    %v285 = vpop.f32.mrb[0].mxu0
    %v286 = vadd.f32 %v188, %v285
    %v287 = vpop.f32.mrb[0].mxu0
    %288 = vmatprep.mubr.f32.mxu0 0.0
    %289 = vmatmul.mubr.f32.gmra.mrb[0].mxu0 %v195
    %v290 = vpop.f32.mrb[0].mxu0
    %v291 = vadd.f32 %v188, %v290
    %v292 = vpop.f32.mrb[0].mxu0
    %293 = vmatprep.mubr.f32.mxu0 0.0
    %294 = vmatmul.mubr.f32.gmra.mrb[0].mxu0 %v198
    %v295 = vpop.f32.mrb[0].mxu0
    %v296 = vadd.f32 %v188, %v295
    %v297 = vpop.f32.mrb[0].mxu0
    %298 = vmatprep.mubr.f32.mxu0 0.0
    %299 = vmatmul.mubr.f32.gmra.mrb[0].mxu0 %v201
    %v300 = vpop.f32.mrb[0].mxu0
    %v301 = vadd.f32 %v188, %v300
    %v302 = vpop.f32.mrb[0].mxu0
    %303 = vmatprep.mubr.f32.mxu0 0.0
    %304 = vmatmul.mubr.f32.gmra.mrb[0].mxu0 %v204
    %v305 = vpop.f32.mrb[0].mxu0
    %v306 = vadd.f32 %v188, %v305
    %v307 = vpop.f32.mrb[0].mxu0
    %308 = vmatprep.mubr.f32.mxu0 0.0
    %309 = vmatmul.mubr.f32.gmra.mrb[0].mxu0 %v207
    %v310 = vpop.f32.mrb[0].mxu0
    %v311 = vadd.f32 %v188, %v310
    %v312 = vpop.f32.mrb[0].mxu0
    %313 = vmatprep.mubr.f32.mxu0 0.0
    %314 = vmatmul.mubr.f32.gmra.mrb[0].mxu0 %v210
    %v315 = vpop.f32.mrb[0].mxu0
    %v316 = vadd.f32 %v188, %v315
    %v317 = vpop.f32.mrb[0].mxu0
    %318 = vmatprep.mubr.f32.mxu0 0.0
    %319 = vmatmul.mubr.f32.gmra.mrb[0].mxu0 %v213
    %v320 = vpop.f32.mrb[0].mxu0
    %v321 = vadd.f32 %v188, %v320
    %v322 = vpop.f32.mrb[0].mxu0
    %323 = vdwg.mxu0
    %vm324 = vcmask 130048
    %325 = vst.msk [vmem:[#allocation2] sm:$0xff] %vm324, %v286
    %327 = vrot.lane.b32.xlu0 %v291, 16
    %v328 = vpop.permute.xlu0 %327
    %vm330 = vcmask 261248
    %331 = vst.msk [vmem:[#allocation2] sm:$0xff] %vm330, %v328
    %333 = vrot.lane.b32.xlu0 %v296, 32
    %v334 = vpop.permute.xlu0 %333
    %vm336 = vcmask 392448
    %337 = vst.msk [vmem:[#allocation2] sm:$0xff] %vm336, %v334
    %339 = vrot.lane.b32.xlu0 %v301, 48
    %v340 = vpop.permute.xlu0 %339
    %vm342 = vcmask 523648
    %343 = vst.msk [vmem:[#allocation2] sm:$0xff] %vm342, %v340
    %345 = vrot.lane.b32.xlu0 %v306, 64
    %v346 = vpop.permute.xlu0 %345
    %vm348 = vcmask 654848
    %349 = vst.msk [vmem:[#allocation2] sm:$0xff] %vm348, %v346
    %351 = vrot.lane.b32.xlu0 %v311, 80
    %v352 = vpop.permute.xlu0 %351
    %vm354 = vcmask 786048
    %355 = vst.msk [vmem:[#allocation2] sm:$0xff] %vm354, %v352
    %357 = vrot.lane.b32.xlu0 %v316, 96
    %v358 = vpop.permute.xlu0 %357
    %vm360 = vcmask 917248
    %361 = vst.msk [vmem:[#allocation2] sm:$0xff] %vm360, %v358
    %363 = vrot.lane.b32.xlu0 %v321, 112
    %v364 = vpop.permute.xlu0 %363
    %vm366 = vcmask 1048448
    %367 = vst.msk [vmem:[#allocation2] sm:$0xff] %vm366, %v364
    // Predicated region
    $region22: #{tpu_custom_call.1} parent=1 // pred_check
      _
    $region23: #{tpu_custom_call.1} parent=1 // pred_check_branch
      %369 = sbr.rel (0) target = $region25
    $region24: #{tpu_custom_call.1} parent=1 // pred_region
      %s371 = ssub.s32 128, 128
      %372 = vsyncadd [#allocation3], %s371
      %s374 = sshll.u32 [#allocation2], 4
      %s375 = int_to_ptr.vmem [resolvable:$true] %s374
      %377 = dma.vmem_to_hbm [thread:$0]  %s375, 128, %s5, [#allocation3]
    $region25: #{tpu_custom_call.1} parent=1 // pred_fallthru
      _
    // Predicated region
    $region26: #{tpu_custom_call.1} parent=1 // pred_check
      _
    $region27: #{tpu_custom_call.1} parent=1 // pred_check_branch
      %379 = sbr.rel (0) target = $region29
    $region28: #{tpu_custom_call.1} parent=1 // pred_region
      %380 = dma.done [#allocation3], 128
    $region29: #{tpu_custom_call.1} parent=1 // pred_fallthru
      _
    %381 = vsyncpa [#allocation3], 1

</llo_original>
